<compile_context>
chip_gen: v7x
topology: tpu7x:2x2x1
jax: 0.10.0
libtpu: 0.0.40
codegen_flags: <defaults>
</compile_context>

<pallas_src>
import functools

import jax
import jax.numpy as jnp
from jax.experimental import pallas as pl
from jax.experimental.pallas import tpu as pltpu

_LANES = 128
_ROW_GROUP = 128  # rows processed per in-kernel sub-group (bounds vreg pressure)


def _gem_kernel(p_ref, x_ref, o_ref, *, eps, hw, rg):
    # p_ref: SMEM (1,) float32 — learnable exponent
    # x_ref: VMEM (TN, HW_pad) input tile (HW_pad = 128-rounded HW; tail lanes
    #        of the edge block are garbage and masked below)
    # o_ref: VMEM (TN, 1) pooled output tile
    tn, hw_pad = x_ref.shape
    k = hw_pad // _LANES                    # >= 1 always
    p = p_ref[0]
    inv_p = 1.0 / p                         # scalar, hoisted out of the loops
    inv_hw = 1.0 / hw                       # python float constant

    n_groups = pl.cdiv(tn, rg)
    for g in range(n_groups):               # static unroll; values die at the
        r0 = g * rg                          # o_ref store each iteration
        rlen = min(rg, tn - r0)              # multiple of 8 by construction
        acc = None
        for c in range(k):
            xs = x_ref[pl.ds(r0, rlen), pl.ds(c * _LANES, _LANES)]
            xs = xs.astype(jnp.float32)
            xc = jnp.maximum(xs, eps)        # clamp(min=eps) -> x > 0
            v = jnp.exp(p * jnp.log(xc))     # x^p for real (learnable) p
            if (c + 1) * _LANES > hw:        # chunk contains padded lanes
                lane = (jax.lax.broadcasted_iota(jnp.int32, (rlen, _LANES), 1)
                        + c * _LANES)
                v = jnp.where(lane < hw, v, 0.0)   # select: NaN-safe masking
            acc = v if acc is None else acc + v
        s = jnp.sum(acc, axis=-1, keepdims=True)   # (rlen, 1) cross-lane reduce
        m = s * inv_hw                              # mean over the true HW
        out = jnp.exp(jnp.log(m) * inv_p)           # m^(1/p)
        o_ref[pl.ds(r0, rlen), :] = out.astype(o_ref.dtype)


def gem_pallas(x, p, eps=1e-6, *, tile_bytes=4 * 1024 * 1024):
    """x: (B, C, H, W) float, p: (1,) float32 -> (B, C, 1, 1)."""
    B, C, H, W = x.shape
    N, HW = B * C, H * W
    HW_pad = pl.cdiv(HW, _LANES) * _LANES     # lane-rounded block width
    N8 = pl.cdiv(N, 8) * 8
    itemsize = jnp.dtype(x.dtype).itemsize

    # Row tile: biggest multiple of 8 with TN * HW_pad * itemsize <= tile_bytes
    # (double-buffered pair stays inside every generation's scoped VMEM),
    # never bigger than the 8-rounded row count.
    TN = max(8, (tile_bytes // (HW_pad * itemsize)) // 8 * 8)
    TN = min(TN, N8)
    num_tiles = pl.cdiv(N, TN)                # last block may be partial

    x2 = x.reshape(N, HW)                     # free reshape, NO padding copy

    out = pl.pallas_call(
        functools.partial(_gem_kernel, eps=eps, hw=HW, rg=min(_ROW_GROUP, TN)),
        out_shape=jax.ShapeDtypeStruct((N, 1), x.dtype),
        grid=(num_tiles,),
        in_specs=[
            pl.BlockSpec(memory_space=pltpu.SMEM),          # p (scalar)
            pl.BlockSpec((TN, HW_pad), lambda i: (i, 0)),   # x row tile
        ],
        out_specs=pl.BlockSpec((TN, 1), lambda i: (i, 0)),
        compiler_params=pltpu.CompilerParams(
            dimension_semantics=("parallel",),
            vmem_limit_bytes=32 * 1024 * 1024),
    )(p, x2)

    return out.reshape(B, C, 1, 1)


def gem_reference(x, p, eps=1e-6):
    xc = jnp.maximum(x, eps)
    xp = jnp.power(xc, p[0])
    m = jnp.mean(xp, axis=(-2, -1), keepdims=True)
    return jnp.power(m, 1.0 / p[0])


if __name__ == "__main__":
    key = jax.random.PRNGKey(0)

    # Deterministic parameter init, matching GeM.__init__: p = ones(1) * 3
    p = jnp.ones((1,), dtype=jnp.float32) * 3.0
    eps = 1e-6

    # 1) Basic case: HW a multiple of 128, single tile.
    x1 = jax.random.uniform(key, (2, 4, 16, 16), dtype=jnp.float32)
    y1 = gem_pallas(x1, p, eps)
    jax.block_until_ready(y1)
    assert y1.shape == (2, 4, 1, 1)
    assert jnp.allclose(y1, gem_reference(x1, p, eps), atol=1e-5, rtol=1e-5)

    # 2) Typical CNN-backbone case: HW = 7*7 = 49 -> lane-edge block + masked sum.
    x2 = jax.random.uniform(jax.random.PRNGKey(1), (2, 4, 7, 7), dtype=jnp.float32)
    y2 = gem_pallas(x2, p, eps)
    jax.block_until_ready(y2)
    assert y2.shape == (2, 4, 1, 1)
    assert jnp.allclose(y2, gem_reference(x2, p, eps), atol=1e-5, rtol=1e-5)

    # 3) Multi-tile grid with N % TN != 0 (tiny tile_bytes forces TN=8, N=26).
    x3 = jax.random.uniform(jax.random.PRNGKey(2), (2, 13, 16, 16), dtype=jnp.float32)
    y3 = gem_pallas(x3, p, eps, tile_bytes=8 * 256 * 4)
    jax.block_until_ready(y3)
    assert y3.shape == (2, 13, 1, 1)
    assert jnp.allclose(y3, gem_reference(x3, p, eps), atol=1e-5, rtol=1e-5)

    # 4) Both paddings at once: N=15 (not a multiple of 8), HW=49.
    x4 = jax.random.uniform(jax.random.PRNGKey(3), (3, 5, 7, 7), dtype=jnp.float32)
    y4 = gem_pallas(x4, p, eps)
    jax.block_until_ready(y4)
    assert y4.shape == (3, 5, 1, 1)
    assert jnp.allclose(y4, gem_reference(x4, p, eps), atol=1e-5, rtol=1e-5)

    print("KERNEL_OK")
</pallas_src>

<mosaic_0001>
module attributes {stable_mosaic.version = 11 : i64} {
  func.func @_gem_kernel(%arg0: i32, %arg1: memref<1xf32, #tpu.memory_space<smem>>, %arg2: memref<8x256xf32, #tpu.memory_space<vmem>>, %arg3: memref<8x1xf32, #tpu.memory_space<vmem>>) attributes {dimension_semantics = [#tpu.dimension_semantics<parallel>], iteration_bounds = array<i64: 1>, scalar_prefetch = 0 : i64, scratch_operands = 0 : i64, tpu.core_type = #tpu.core_type<tc>, window_params = [{transform_indices = @transform_0, window_bounds = array<i64: 1>}, {transform_indices = @transform_1, window_bounds = array<i64: 8, 256>}, {transform_indices = @transform_2, window_bounds = array<i64: 8, 1>}]} {
    %c0 = arith.constant 0 : index
    %0 = memref.load %arg1[%c0] : memref<1xf32, #tpu.memory_space<smem>>
    %cst = arith.constant 1.000000e+00 : f32
    %1 = arith.divf %cst, %0 : f32
    %c0_0 = arith.constant 0 : index
    %c0_1 = arith.constant 0 : index
    %2 = vector.load %arg2[%c0_0, %c0_1] : memref<8x256xf32, #tpu.memory_space<vmem>>, vector<8x128xf32>
    %cst_2 = arith.constant 9.99999997E-7 : f32
    %3 = vector.broadcast %cst_2 : f32 to vector<8x128xf32>
    %4 = arith.maximumf %2, %3 : vector<8x128xf32>
    %5 = math.log %4 : vector<8x128xf32>
    %6 = vector.broadcast %0 : f32 to vector<8x128xf32>
    %7 = arith.mulf %6, %5 : vector<8x128xf32>
    %8 = math.exp %7 : vector<8x128xf32>
    %c0_3 = arith.constant 0 : index
    %c128 = arith.constant 128 : index
    %9 = vector.load %arg2[%c0_3, %c128] : memref<8x256xf32, #tpu.memory_space<vmem>>, vector<8x128xf32>
    %cst_4 = arith.constant 9.99999997E-7 : f32
    %10 = vector.broadcast %cst_4 : f32 to vector<8x128xf32>
    %11 = arith.maximumf %9, %10 : vector<8x128xf32>
    %12 = math.log %11 : vector<8x128xf32>
    %13 = vector.broadcast %0 : f32 to vector<8x128xf32>
    %14 = arith.mulf %13, %12 : vector<8x128xf32>
    %15 = math.exp %14 : vector<8x128xf32>
    %16 = arith.addf %8, %15 : vector<8x128xf32>
    %cst_5 = arith.constant dense<0.000000e+00> : vector<8xf32>
    %17 = vector.multi_reduction <add>, %16, %cst_5 [1] : vector<8x128xf32> to vector<8xf32>
    %18 = vector.shape_cast %17 : vector<8xf32> to vector<8x1xf32>
    %cst_6 = arith.constant 3.906250e-03 : f32
    %19 = vector.broadcast %cst_6 : f32 to vector<8x1xf32>
    %20 = arith.mulf %18, %19 : vector<8x1xf32>
    %21 = math.log %20 : vector<8x1xf32>
    %22 = vector.broadcast %1 : f32 to vector<8x1xf32>
    %23 = arith.mulf %21, %22 : vector<8x1xf32>
    %24 = math.exp %23 : vector<8x1xf32>
    %c0_7 = arith.constant 0 : index
    %c0_8 = arith.constant 0 : index
    %25 = vector.load %arg3[%c0_7, %c0_8] : memref<8x1xf32, #tpu.memory_space<vmem>>, vector<8x1xf32>
    tpu.vector_store %arg3[%c0_7, %c0_8], %24 {strides = array<i32>} : memref<8x1xf32, #tpu.memory_space<vmem>>, vector<8x1xf32>,
    return
  }
  func.func @transform_0(%arg0: i32) -> i32 {
    %c0_i32 = arith.constant 0 : i32
    %c0_i32_0 = arith.constant 0 : i32
    return %c0_i32 : i32
  }
  func.func @transform_1(%arg0: i32) -> (i32, i32) {
    %c0_i32 = arith.constant 0 : i32
    %c0_i32_0 = arith.constant 0 : i32
    return %arg0, %c0_i32 : i32, i32
  }
  func.func @transform_2(%arg0: i32) -> (i32, i32) {
    %c0_i32 = arith.constant 0 : i32
    %c0_i32_0 = arith.constant 0 : i32
    return %arg0, %c0_i32 : i32, i32
  }
}

</mosaic_0001>

<llo_original>
// kernel: tpu_custom_call.1
$region0: #{tpu_custom_call.1}
  #allocation0 [shape = 'u32[]', space=smem, size = 0x4, offset = 0x4, fixed_abs, tag = 'smem constant byte address 0x4 - core index']
  #allocation1 [shape = 'u32[144,128]{1,0:T(1,128)}', space=vmem, size = 0x12000, scoped, tag = 'internal scratch']
  #allocation2 [shape = 'f32[1]{0:T(128)S(6)}', space=smem, size = 0x200, scoped, tag = 'scoped memory for tpu_custom_call.1']
  %s0 = inlined_call_operand.<no memory space> [shape: f32[1], index: 0, kind: input, shape index: {}]
  %s1 = inlined_call_operand.hbm [shape: f32[8,256], index: 1, kind: input, shape index: {}]
  %s2 = inlined_call_operand.vmem [shape: f32[8,1], index: 2, kind: output, shape index: {}]
  %s3 = sld [smem:[#allocation0]]
  $region22: #{tpu_custom_call.1} parent=0
    _
  %s5 = ssub.s32 1, %s3
  %s6 = scalar_select 0, %s5, %s3
  %7 = sst [smem:[#allocation2]] %s0
  $region1: #{tpu_custom_call.1} parent=0
    #allocation3 [shape = 'u8[8192]{0}', space=vmem, size = 0x2000, scoped, tag = 'input window, operand 1, single buffered']
    #allocation4 [shape = 's32[1]{0}', space=sflag, size = 0x4, scoped, tag = 'scoped memory for tpu_custom_call.1']
    %8 = vsyncpa [#allocation4], 0
    // Predicated region
    $region2: #{tpu_custom_call.1} parent=1 // pred_check
      _
    $region3: #{tpu_custom_call.1} parent=1 // pred_check_branch
      %10 = sbr.rel (0) target = $region5
    $region4: #{tpu_custom_call.1} parent=1 // pred_region
      _
    $region5: #{tpu_custom_call.1} parent=1 // pred_fallthru
      _
    // Predicated region
    $region6: #{tpu_custom_call.1} parent=1 // pred_check
      _
    $region7: #{tpu_custom_call.1} parent=1 // pred_check_branch
      %12 = sbr.rel (0) target = $region9
    $region8: #{tpu_custom_call.1} parent=1 // pred_region
      %s14 = ssub.s32 256, 256
      %15 = vsyncadd [#allocation4], %s14
      %s17 = sshll.u32 [#allocation3], 4
      %s18 = int_to_ptr.vmem [resolvable:$true] %s17
      %20 = dma.hbm_to_vmem [thread:$0]  %s1, 256, %s18, [#allocation4]
    $region9: #{tpu_custom_call.1} parent=1 // pred_fallthru
      _
    // Predicated region
    $region10: #{tpu_custom_call.1} parent=1 // pred_check
      _
    $region11: #{tpu_custom_call.1} parent=1 // pred_check_branch
      %22 = sbr.rel (0) target = $region13
    $region12: #{tpu_custom_call.1} parent=1 // pred_region
      %23 = dma.done [#allocation4], 256
    $region13: #{tpu_custom_call.1} parent=1 // pred_fallthru
      _
    %s24 = sld [smem:[#allocation2]]
    %v25 = vstv %s24
    %v26 = vrcp.pop %v25
    %s27 = vtos %v26
    %v28 = vld [vmem:[#allocation3] sm:$0xff]
    %v29 = vmax.f32 %v28, 1e-06
    %v30 = vlog2.pop %v29
    %v31 = vmul.f32 %v30, 0.6931472
    %v32 = vstv %s24
    %v33 = vmul.f32 %v32, %v31
    %v34 = vmul.f32 %v33, 1.442695
    %v35 = vpow.pop %v34
    %v36 = vld [vmem:[#allocation3 + $0x8] sm:$0xff]
    %v37 = vmax.f32 %v36, 1e-06
    %v38 = vlog2.pop %v37
    %v39 = vmul.f32 %v38, 0.6931472
    %v40 = vmul.f32 %v32, %v39
    %v41 = vmul.f32 %v40, 1.442695
    %v42 = vpow.pop %v41
    %v43 = vadd.f32 %v35, %v42
    %44 = vadd.xlane.f32.xlu0 %v43
    %v45 = vpop.xlane.xlu0 %44
    %v46 = vmul.f32 %v45, 0.00390625
    %v47 = vlog2.pop %v46
    %v48 = vmul.f32 %v47, 0.6931472
    %v49 = vstv %s27
    %v50 = vmul.f32 %v48, %v49
    %v51 = vmul.f32 %v50, 1.442695
    %v52 = vpow.pop %v51
    %vm53 = vcmask 7168
    %54 = vst.msk [vmem:[%s2] sm:$0xff] %vm53, %v52
    // Predicated region
    $region14: #{tpu_custom_call.1} parent=1 // pred_check
      _
    $region15: #{tpu_custom_call.1} parent=1 // pred_check_branch
      %56 = sbr.rel (0) target = $region17
    $region16: #{tpu_custom_call.1} parent=1 // pred_region
      _
    $region17: #{tpu_custom_call.1} parent=1 // pred_fallthru
      _
    // Predicated region
    $region18: #{tpu_custom_call.1} parent=1 // pred_check
      _
    $region19: #{tpu_custom_call.1} parent=1 // pred_check_branch
      %58 = sbr.rel (0) target = $region21
    $region20: #{tpu_custom_call.1} parent=1 // pred_region
      _
    $region21: #{tpu_custom_call.1} parent=1 // pred_fallthru
      _
    %59 = vsyncpa [#allocation4], 1

</llo_original>
